<compile_context>
chip_gen: v5e
topology: v5e:2x2
jax: 0.10.0
libtpu: 0.0.40
codegen_flags: <defaults>
</compile_context>

<pallas_src>
import functools

import jax
import jax.numpy as jnp
import numpy as np
from jax.experimental import pallas as pl
from jax.experimental.pallas import tpu as pltpu


def _round_down_128(v):
    return max(128, (int(v) // 128) * 128)


def _vmem_budget_bytes():
    """Per-generation VMEM budget for block double-buffering."""
    try:
        cap = int(pltpu.get_tpu_info().vmem_capacity_bytes)
    except Exception:
        cap = 64 << 20  # conservative fallback (v7x per-TC VMEM)
    # ~60% of capacity: ~38 MiB on v7x (64 MiB), ~76 MiB on v5e/v6e (128 MiB).
    return max(32 << 20, min(int(cap * 0.6), 96 << 20))


def _pick_pixel_tile(hw, c_in, c_out, budget_bytes,
                     *, target_x_bytes=1 << 20, max_tile=32768):
    """Pixel tile: multiple of 128, ~target_x_bytes of x per block, VMEM-capped."""
    hw128 = ((hw + 127) // 128) * 128
    thw = _round_down_128(target_x_bytes // (4 * c_in))
    thw = min(thw, max_tile)
    # Double-buffered VMEM: x + out blocks plus the (small) weight/const blocks.
    wbytes = 2 * (c_out * c_in + c_out) * 4
    avail = max(budget_bytes - wbytes, 8 * (c_in + c_out) * 128)
    thw_cap = _round_down_128(avail // (2 * (c_in + c_out) * 4))
    thw = max(128, min(thw, thw_cap, hw128))
    return thw


def _sine_layer_kernel(x_ref, w_ref, c_ref, o_ref, *, c_in, use_vpu):
    # x_ref: (C_in, THW)   lane-dense pixel tile (straight NCHW view)
    # w_ref: (C_out, C_in) omega-folded weight  (omega * W)
    # c_ref: (C_out, 1)    omega*bias + phase
    # o_ref: (C_out, THW)
    x = x_ref[...]
    w = w_ref[...]
    c = c_ref[...].astype(jnp.float32)
    if use_vpu:
        # Truly tiny contraction (C_in, C_out <= 8): unrolled VPU mul-add avoids
        # a degenerate padded MXU matmul.  Accumulate in f32 (matches MXU path).
        # TODO(synk): stride-0 sublane-broadcast load (pl.ds(k, C_out, stride=0))
        # would move the per-k row broadcast off the XLU; kept simple for safety.
        xf = x.astype(jnp.float32)
        wf = w.astype(jnp.float32)
        acc = wf[:, 0:1] * xf[0:1, :]                    # (C_out, THW)
        for k in range(1, c_in):
            acc = acc + wf[:, k:k + 1] * xf[k:k + 1, :]
    else:
        acc = jnp.dot(w, x, preferred_element_type=jnp.float32)
    o_ref[...] = jnp.sin(acc + c).astype(o_ref.dtype)


def sine_layer_c_forward(x_nchw, weight, bias, omega_w, phase_w):
    """Pallas SineLayerC.forward for kernel_size=1, groups=1.

    x_nchw : (N, C_in, H, W)  float32
    weight : (C_out, C_in, 1, 1)  (PyTorch Conv2d weight layout)
    bias   : (C_out,)
    omega_w: (1, C_out, 1, 1)
    phase_w: (1, C_out, 1, 1)
    returns: (N, C_out, H, W)
    """
    N, C_in, H, W = x_nchw.shape
    C_out = weight.shape[0]
    HW = H * W

    # Fold omega/phase into weight/bias (algebraically identical to the module).
    omega = omega_w.reshape(C_out, 1)
    phase = phase_w.reshape(C_out, 1)
    w_mat = weight.reshape(C_out, C_in) * omega            # (C_out, C_in)
    c_col = omega * bias.reshape(C_out, 1) + phase         # (C_out, 1)

    # Transpose-free: NCHW -> (N, C_in, H*W) is a pure reshape (no copy).
    x_mat = x_nchw.reshape(N, C_in, HW)

    budget = _vmem_budget_bytes()
    thw = _pick_pixel_tile(HW, C_in, C_out, budget)

    # Pad the pixel axis so the lane-dense tile divides it evenly (slice after).
    hw_total = pl.cdiv(HW, thw) * thw
    if hw_total != HW:
        x_mat = jnp.pad(x_mat, ((0, 0), (0, 0), (0, hw_total - HW)))

    # Pixel axis leads so v7x megacore sharding splits it (N is often 1 / odd).
    grid = (hw_total // thw, N)

    use_vpu = (C_in <= 8) and (C_out <= 8)
    kernel = functools.partial(_sine_layer_kernel, c_in=C_in, use_vpu=use_vpu)

    cost = pl.CostEstimate(
        flops=2 * N * HW * C_in * C_out,
        transcendentals=N * HW * C_out,
        bytes_accessed=4 * (N * HW * (C_in + C_out) + C_out * C_in + C_out),
    )

    out_mat = pl.pallas_call(
        kernel,
        out_shape=jax.ShapeDtypeStruct((N, C_out, hw_total), x_nchw.dtype),
        grid_spec=pltpu.PrefetchScalarGridSpec(
            num_scalar_prefetch=0,
            grid=grid,
            in_specs=[
                # batch dim squeezed out of the kernel view
                pl.BlockSpec((None, C_in, thw), lambda j, n: (n, 0, j)),
                pl.BlockSpec((C_out, C_in), lambda j, n: (0, 0)),
                pl.BlockSpec((C_out, 1), lambda j, n: (0, 0)),
            ],
            out_specs=pl.BlockSpec((None, C_out, thw), lambda j, n: (n, 0, j)),
        ),
        compiler_params=pltpu.CompilerParams(
            dimension_semantics=("parallel", "parallel"),
            vmem_limit_bytes=int(budget)),
        cost_estimate=cost,
    )(x_mat, w_mat, c_col)

    if hw_total != HW:
        out_mat = out_mat[:, :, :HW]
    # Pure reshape back to NCHW (no transpose needed).
    return out_mat.reshape(N, C_out, H, W)


def init_sine_layer_c_params(key, in_features, out_features,
                             is_first=False, omega_0=1.0):
    """Deterministic parameter init matching SineLayerC.__init__ / init_weights."""
    k_w, k_b = jax.random.split(key)
    if is_first:
        bound = 1.0 / in_features
    elif omega_0 < 1:
        bound = np.sqrt(6.0 / in_features)
    else:
        bound = np.sqrt(6.0 / in_features) / int(omega_0)
    weight = jax.random.uniform(
        k_w, (out_features, in_features, 1, 1),
        minval=-bound, maxval=bound, dtype=jnp.float32)
    # PyTorch Conv2d default bias init: U(-1/sqrt(fan_in), 1/sqrt(fan_in))
    b_bound = 1.0 / np.sqrt(in_features)
    bias = jax.random.uniform(
        k_b, (out_features,), minval=-b_bound, maxval=b_bound, dtype=jnp.float32)
    # omega_weight_0 = randn*0 + omega_0 ;  phase_weight_0 = randn*0
    omega_w = jnp.full((1, out_features, 1, 1), omega_0, dtype=jnp.float32)
    phase_w = jnp.zeros((1, out_features, 1, 1), dtype=jnp.float32)
    return weight, bias, omega_w, phase_w


# TODO(synk): general kernel_size>1 / groups>1 conv path not implemented
# (module defaults are kernel_size=1, groups=1, which is what this kernel covers).
# TODO(synk): optional bf16 cast of w/x tiles before jnp.dot for wide-SIREN on
# v5e (MXU-bound there); kept f32 to match the reference numerics exactly.


if __name__ == "__main__":
    key = jax.random.PRNGKey(0)
    k_x, k_p = jax.random.split(key)

    # Small shapes: batch=2, in_channels=4, out_channels=8, spatial=16x16
    N, C_in, C_out, H, W = 2, 4, 8, 16, 16
    x = jax.random.normal(k_x, (N, C_in, H, W), dtype=jnp.float32)

    weight, bias, omega_w, phase_w = init_sine_layer_c_params(
        k_p, C_in, C_out, is_first=False, omega_0=1.0)

    out = sine_layer_c_forward(x, weight, bias, omega_w, phase_w)
    out = jax.block_until_ready(out)

    # Pure-JAX reference (unfused, exactly mirrors the PyTorch forward).
    ref = jnp.einsum("nchw,oc->nohw", x, weight.reshape(C_out, C_in))
    ref = ref + bias.reshape(1, C_out, 1, 1)
    ref = jnp.sin(omega_w * ref + phase_w)
    np.testing.assert_allclose(np.asarray(out), np.asarray(ref),
                               rtol=1e-5, atol=1e-5)

    assert out.shape == (N, C_out, H, W)
    print("KERNEL_OK")
</pallas_src>

<mosaic_0001>
module attributes {stable_mosaic.version = 11 : i64} {
  func.func @_sine_layer_kernel(%arg0: i32, %arg1: i32, %arg2: memref<1x4x256xf32, #tpu.memory_space<vmem>>, %arg3: memref<8x4xf32, #tpu.memory_space<vmem>>, %arg4: memref<8x1xf32, #tpu.memory_space<vmem>>, %arg5: memref<1x8x256xf32, #tpu.memory_space<vmem>>) attributes {dimension_semantics = [#tpu.dimension_semantics<parallel>, #tpu.dimension_semantics<parallel>], iteration_bounds = array<i64: 1, 2>, scalar_prefetch = 0 : i64, scratch_operands = 0 : i64, tpu.core_type = #tpu.core_type<tc>, window_params = [{transform_indices = @transform_0, window_bounds = array<i64: 1, 4, 256>}, {pipeline_mode = #tpu.pipeline_mode<synchronous>, transform_indices = @transform_1, window_bounds = array<i64: 8, 4>}, {pipeline_mode = #tpu.pipeline_mode<synchronous>, transform_indices = @transform_2, window_bounds = array<i64: 8, 1>}, {transform_indices = @transform_3, window_bounds = array<i64: 1, 8, 256>}]} {
    %c0 = arith.constant 0 : index
    %c0_0 = arith.constant 0 : index
    %c0_1 = arith.constant 0 : index
    %0 = vector.load %arg2[%c0, %c0_0, %c0_1] : memref<1x4x256xf32, #tpu.memory_space<vmem>>, vector<1x4x256xf32>
    %1 = vector.shape_cast %0 : vector<1x4x256xf32> to vector<4x256xf32>
    %c0_2 = arith.constant 0 : index
    %c0_3 = arith.constant 0 : index
    %2 = vector.load %arg3[%c0_2, %c0_3] : memref<8x4xf32, #tpu.memory_space<vmem>>, vector<8x4xf32>
    %c0_4 = arith.constant 0 : index
    %c0_5 = arith.constant 0 : index
    %3 = vector.load %arg4[%c0_4, %c0_5] : memref<8x1xf32, #tpu.memory_space<vmem>>, vector<8x1xf32>
    %4 = vector.extract_strided_slice %2 {offsets = [0, 0], sizes = [8, 1], strides = [1, 1]} : vector<8x4xf32> to vector<8x1xf32>
    %5 = vector.extract_strided_slice %1 {offsets = [0, 0], sizes = [1, 256], strides = [1, 1]} : vector<4x256xf32> to vector<1x256xf32>
    %6 = vector.broadcast %4 : vector<8x1xf32> to vector<8x256xf32>
    %7 = vector.broadcast %5 : vector<1x256xf32> to vector<8x256xf32>
    %8 = arith.mulf %6, %7 : vector<8x256xf32>
    %9 = vector.extract_strided_slice %2 {offsets = [0, 1], sizes = [8, 1], strides = [1, 1]} : vector<8x4xf32> to vector<8x1xf32>
    %10 = vector.extract_strided_slice %1 {offsets = [1, 0], sizes = [1, 256], strides = [1, 1]} : vector<4x256xf32> to vector<1x256xf32>
    %11 = vector.broadcast %9 : vector<8x1xf32> to vector<8x256xf32>
    %12 = vector.broadcast %10 : vector<1x256xf32> to vector<8x256xf32>
    %13 = arith.mulf %11, %12 : vector<8x256xf32>
    %14 = arith.addf %8, %13 : vector<8x256xf32>
    %15 = vector.extract_strided_slice %2 {offsets = [0, 2], sizes = [8, 1], strides = [1, 1]} : vector<8x4xf32> to vector<8x1xf32>
    %16 = vector.extract_strided_slice %1 {offsets = [2, 0], sizes = [1, 256], strides = [1, 1]} : vector<4x256xf32> to vector<1x256xf32>
    %17 = vector.broadcast %15 : vector<8x1xf32> to vector<8x256xf32>
    %18 = vector.broadcast %16 : vector<1x256xf32> to vector<8x256xf32>
    %19 = arith.mulf %17, %18 : vector<8x256xf32>
    %20 = arith.addf %14, %19 : vector<8x256xf32>
    %21 = vector.extract_strided_slice %2 {offsets = [0, 3], sizes = [8, 1], strides = [1, 1]} : vector<8x4xf32> to vector<8x1xf32>
    %22 = vector.extract_strided_slice %1 {offsets = [3, 0], sizes = [1, 256], strides = [1, 1]} : vector<4x256xf32> to vector<1x256xf32>
    %23 = vector.broadcast %21 : vector<8x1xf32> to vector<8x256xf32>
    %24 = vector.broadcast %22 : vector<1x256xf32> to vector<8x256xf32>
    %25 = arith.mulf %23, %24 : vector<8x256xf32>
    %26 = arith.addf %20, %25 : vector<8x256xf32>
    %27 = vector.broadcast %3 : vector<8x1xf32> to vector<8x256xf32>
    %28 = arith.addf %26, %27 : vector<8x256xf32>
    %29 = math.sin %28 : vector<8x256xf32>
    %c0_6 = arith.constant 0 : index
    %c0_7 = arith.constant 0 : index
    %c0_8 = arith.constant 0 : index
    %30 = vector.load %arg5[%c0_6, %c0_7, %c0_8] : memref<1x8x256xf32, #tpu.memory_space<vmem>>, vector<1x8x256xf32>
    %31 = vector.shape_cast %30 : vector<1x8x256xf32> to vector<8x256xf32>
    %32 = vector.shape_cast %29 : vector<8x256xf32> to vector<1x8x256xf32>
    tpu.vector_store %arg5[%c0_6, %c0_7, %c0_8], %32 {strides = array<i32>} : memref<1x8x256xf32, #tpu.memory_space<vmem>>, vector<1x8x256xf32>,
    return
  }
  func.func @transform_0(%arg0: i32, %arg1: i32) -> (i32, i32, i32) {
    %c0_i32 = arith.constant 0 : i32
    %c0_i32_0 = arith.constant 0 : i32
    return %arg1, %c0_i32, %arg0 : i32, i32, i32
  }
  func.func @transform_1(%arg0: i32, %arg1: i32) -> (i32, i32) {
    %c0_i32 = arith.constant 0 : i32
    %c0_i32_0 = arith.constant 0 : i32
    %c0_i32_1 = arith.constant 0 : i32
    return %c0_i32, %c0_i32_0 : i32, i32
  }
  func.func @transform_2(%arg0: i32, %arg1: i32) -> (i32, i32) {
    %c0_i32 = arith.constant 0 : i32
    %c0_i32_0 = arith.constant 0 : i32
    %c0_i32_1 = arith.constant 0 : i32
    return %c0_i32, %c0_i32_0 : i32, i32
  }
  func.func @transform_3(%arg0: i32, %arg1: i32) -> (i32, i32, i32) {
    %c0_i32 = arith.constant 0 : i32
    %c0_i32_0 = arith.constant 0 : i32
    return %arg1, %c0_i32, %arg0 : i32, i32, i32
  }
}

</mosaic_0001>

<llo_original>
// kernel: tpu_custom_call.1
$region0: #{tpu_custom_call.1}
  #allocation0 [shape = 'u32[]', space=smem, size = 0x4, offset = 0x4, fixed_abs, tag = 'smem constant byte address 0x4 - core index']
  #allocation1 [shape = 'u32[72,128]{1,0:T(1,128)}', space=vmem, size = 0x9000, scoped, tag = 'internal scratch']
  %s0 = inlined_call_operand.vmem [shape: f32[2,4,256], index: 0, kind: input, shape index: {}]
  %s1 = inlined_call_operand.vmem [shape: f32[8,4], index: 1, kind: input, shape index: {}]
  %s2 = inlined_call_operand.vmem [shape: f32[8,1], index: 2, kind: input, shape index: {}]
  %s3 = inlined_call_operand.hbm [shape: f32[2,8,256], index: 3, kind: output, shape index: {}]
  %s4 = sld [smem:[#allocation0]]
  $region45: #{tpu_custom_call.1} parent=0
    _
  %s6 = ssub.s32 1, %s4
  %s7 = scalar_select 0, %s6, %s4
  $region1: #{tpu_custom_call.1} parent=0
    #allocation2 [shape = 'u8[16384]{0}', space=vmem, size = 0x4000, scoped, tag = 'output window, operand 0']
    #allocation3 [shape = 's32[2]{0}', space=sflag, size = 0x8, scoped, tag = 'scoped memory for tpu_custom_call.1']
    %8 = vsyncpa [#allocation3], 0
    %s9 = scalar_lea.sflag [#allocation3], 1
    %10 = vsyncpa %s9, 0
    loop: start=0, step=1, limit=4
    $region2: #{tpu_custom_call.1} parent=1 // loop_pre_header
      _
    $region3: #{tpu_custom_call.1} parent=1 // loop_header
      %s12 = sphi 0, %s16
      %p13 = scmp.ge.s32.totalorder %s12, 4
      %s19 = sphi 0, %s31
      %s20 = sphi 0, %s27
      %s21 = sphi 0, %s19
      %s22 = sphi 0, %s20
      %s23 = sphi 0, %s21
      %s24 = sphi 0, %s22
      %s36 = sphi 0, %s38
      %s39 = sphi 0, %s36
      %s40 = sphi 0, %s39
      %s56 = sphi 0, %s40
      %s60 = sphi 0, %s60
      %s62 = sphi 0, %s60
      %s63 = sphi 0, %s62
      %s77 = sphi 0, %s63
      %s81 = sphi 0, %s81
      %s83 = sphi 0, %s81
      %s84 = sphi 0, %s83
      %s98 = sphi 0, %s84
      %s106 = sphi 0, %s108
      %s109 = sphi 0, %s106
      %s110 = sphi 0, %s109
      %s126 = sphi 0, %s110
    $region4: #{tpu_custom_call.1} parent=1 // loop_header_branch
      %15 = sbr.rel (%p13) target = $region8
    $region5: #{tpu_custom_call.1} parent=1 // loop_body
      %s17 = ssub.s32 %s12, 1
      %s18 = ssub.s32 %s12, 2
      %s25 = sadd.s32 1, %s20
      %p26 = scmp.ge.s32.totalorder %s25, 2
      %s27 = scalar_select %p26, 0, %s25
      %s28 = sadd.s32 1, %s19
      %s29 = scalar_select %p26, %s28, %s19
      %p30 = scmp.ge.s32.totalorder %s29, 1
      %s31 = scalar_select %p30, 0, %s29
      %s32 = ssub.s32 %s20, %s27
      %s33 = ssub.s32 %s19, %s31
      %s34 = sor.u32 %s32, %s33
      %p35 = scmp.eq.s32.totalorder %s34, 0
      %s37 = sadd.s32 %s36, 1
      %s38 = scalar_select %p35, %s36, %s37
      %p41 = pneg %p35
      %p42 = scmp.eq.s32.totalorder %s12, 1
      %p43 = por %p41, %p42
      %p44 = scmp.ne.s32.totalorder %s36, %s39
      %p45 = scmp.eq.s32.totalorder %s12, 0
      %p46 = por %p44, %p45
      %p47 = scmp.ne.s32.totalorder %s36, %s39
      %p48 = scmp.eq.s32.totalorder %s17, 1
      %p49 = por %p47, %p48
      %p50 = scmp.ne.s32.totalorder %s39, %s40
      %p51 = scmp.eq.s32.totalorder %s17, 0
      %p52 = por %p50, %p51
      %p53 = scmp.ne.s32.totalorder %s39, %s40
      %p54 = scmp.eq.s32.totalorder %s18, 1
      %p55 = por %p53, %p54
      %p57 = scmp.ne.s32.totalorder %s40, %s56
      %p58 = scmp.eq.s32.totalorder %s18, 0
      %p59 = por %p57, %p58
      %s61 = sadd.s32 %s60, 1
      %p64 = scmp.eq.s32.totalorder %s12, 1
      %p65 = scmp.ne.s32.totalorder %s60, %s62
      %p66 = scmp.eq.s32.totalorder %s12, 0
      %p67 = por %p65, %p66
      %p68 = scmp.ne.s32.totalorder %s60, %s62
      %p69 = scmp.eq.s32.totalorder %s17, 1
      %p70 = por %p68, %p69
      %p71 = scmp.ne.s32.totalorder %s62, %s63
      %p72 = scmp.eq.s32.totalorder %s17, 0
      %p73 = por %p71, %p72
      %p74 = scmp.ne.s32.totalorder %s62, %s63
      %p75 = scmp.eq.s32.totalorder %s18, 1
      %p76 = por %p74, %p75
      %p78 = scmp.ne.s32.totalorder %s63, %s77
      %p79 = scmp.eq.s32.totalorder %s18, 0
      %p80 = por %p78, %p79
      %s82 = sadd.s32 %s81, 1
      %p85 = scmp.eq.s32.totalorder %s12, 1
      %p86 = scmp.ne.s32.totalorder %s81, %s83
      %p87 = scmp.eq.s32.totalorder %s12, 0
      %p88 = por %p86, %p87
      %p89 = scmp.ne.s32.totalorder %s81, %s83
      %p90 = scmp.eq.s32.totalorder %s17, 1
      %p91 = por %p89, %p90
      %p92 = scmp.ne.s32.totalorder %s83, %s84
      %p93 = scmp.eq.s32.totalorder %s17, 0
      %p94 = por %p92, %p93
      %p95 = scmp.ne.s32.totalorder %s83, %s84
      %p96 = scmp.eq.s32.totalorder %s18, 1
      %p97 = por %p95, %p96
      %p99 = scmp.ne.s32.totalorder %s84, %s98
      %p100 = scmp.eq.s32.totalorder %s18, 0
      %p101 = por %p99, %p100
      %s102 = ssub.s32 %s20, %s27
      %s103 = ssub.s32 %s19, %s31
      %s104 = sor.u32 %s102, %s103
      %p105 = scmp.eq.s32.totalorder %s104, 0
      %s107 = sadd.s32 %s106, 1
      %s108 = scalar_select %p105, %s106, %s107
      %p111 = pneg %p105
      %p112 = scmp.eq.s32.totalorder %s12, 1
      %p113 = por %p111, %p112
      %p114 = scmp.ne.s32.totalorder %s106, %s109
      %p115 = scmp.eq.s32.totalorder %s12, 0
      %p116 = por %p114, %p115
      %p117 = scmp.ne.s32.totalorder %s106, %s109
      %p118 = scmp.eq.s32.totalorder %s17, 1
      %p119 = por %p117, %p118
      %p120 = scmp.ne.s32.totalorder %s109, %s110
      %p121 = scmp.eq.s32.totalorder %s17, 0
      %p122 = por %p120, %p121
      %p123 = scmp.ne.s32.totalorder %s109, %s110
      %p124 = scmp.eq.s32.totalorder %s18, 1
      %p125 = por %p123, %p124
      %p127 = scmp.ne.s32.totalorder %s110, %s126
      %p128 = scmp.eq.s32.totalorder %s18, 0
      %p129 = por %p127, %p128
      %p130 = scmp.le.s32.totalorder 1, %s12
      %p131 = scmp.lt.s32.totalorder %s12, 3
      %p132 = pnand %p130, %p131
      %p133 = pneg %p132
      // Predicated region
      $region9: #{tpu_custom_call.1} parent=5 // pred_check
        _
      $region10: #{tpu_custom_call.1} parent=5 // pred_check_branch
        %135 = sbr.rel (%p132) target = $region12
      $region11: #{tpu_custom_call.1} parent=5 // pred_region
        %s136 = ssub.s32 %s12, 1
        // Predicated region
        $region13: #{tpu_custom_call.1} parent=11 // pred_check
          %p137 = pneg %p73
        $region14: #{tpu_custom_call.1} parent=11 // pred_check_branch
          %139 = sbr.rel (%p137) target = $region16
        $region15: #{tpu_custom_call.1} parent=11 // pred_region
          _
        $region16: #{tpu_custom_call.1} parent=11 // pred_fallthru
          _
        // Predicated region
        $region17: #{tpu_custom_call.1} parent=11 // pred_check
          %p140 = pneg %p94
        $region18: #{tpu_custom_call.1} parent=11 // pred_check_branch
          %142 = sbr.rel (%p140) target = $region20
        $region19: #{tpu_custom_call.1} parent=11 // pred_region
          _
        $region20: #{tpu_custom_call.1} parent=11 // pred_fallthru
          _
      $region12: #{tpu_custom_call.1} parent=5 // pred_fallthru
        _
      %p143 = scmp.lt.s32.totalorder %s12, 2
      // Predicated region
      $region21: #{tpu_custom_call.1} parent=5 // pred_check
        %p144 = pneg %p143
      $region22: #{tpu_custom_call.1} parent=5 // pred_check_branch
        %146 = sbr.rel (%p144) target = $region24
      $region23: #{tpu_custom_call.1} parent=5 // pred_region
        // Predicated region
        $region25: #{tpu_custom_call.1} parent=23 // pred_check
          %p147 = pneg %p46
        $region26: #{tpu_custom_call.1} parent=23 // pred_check_branch
          %149 = sbr.rel (%p147) target = $region28
        $region27: #{tpu_custom_call.1} parent=23 // pred_region
          %s150 = smul.u32 2, %s19
          %p151 = scmp.lt.s32.totalorder %s20, 1
          %s152 = scalar_select %p151, %s20, 1
          %p153 = scmp.lt.s32.totalorder %s150, 1
          %s154 = scalar_select %p153, %s150, 1
          %s155 = smul.addr %s152, 2
          %s156 = sadd.s32 %s154, %s155
          %s157 = smul.addr %s156, 4
          %s158 = scalar_lea.vmem %s0, %s157
          %s159 = smul.u32 2, %s19
        $region28: #{tpu_custom_call.1} parent=23 // pred_fallthru
          _
      $region24: #{tpu_custom_call.1} parent=5 // pred_fallthru
        _
      %p160 = scmp.le.s32.totalorder 1, %s12
      %p161 = scmp.lt.s32.totalorder %s12, 3
      %p162 = pnand %p160, %p161
      %p163 = pneg %p162
      // Predicated region
      $region29: #{tpu_custom_call.1} parent=5 // pred_check
        _
      $region30: #{tpu_custom_call.1} parent=5 // pred_check_branch
        %165 = sbr.rel (%p162) target = $region32
      $region31: #{tpu_custom_call.1} parent=5 // pred_region
        %s166 = ssub.s32 %s12, 1
        %s167 = smul.u32 2, %s21
        %p168 = scmp.lt.s32.totalorder %s22, 1
        %s169 = scalar_select %p168, %s22, 1
        %p170 = scmp.lt.s32.totalorder %s167, 1
        %s171 = scalar_select %p170, %s167, 1
        %s172 = smul.addr %s169, 2
        %s173 = sadd.s32 %s171, %s172
        %s174 = smul.addr %s173, 4
        %s175 = scalar_lea.vmem %s0, %s174
        %p176 = pneg %p52
        %p177 = pneg %p49
        %p178 = pneg %p73
        %p179 = pneg %p70
        %p180 = pneg %p94
        %p181 = pneg %p91
        %p182 = pneg %p122
        %p183 = pneg %p119
        %s184 = sand.u32 %s109, 1
        %s185 = scalar_lea.sflag [#allocation3], %s184
        %s186 = sand.u32 %s109, 1
        %s187 = smul.addr %s186, 16
        %s188 = scalar_lea.vmem [#allocation2], %s187
        %s189 = smul.u32 2, %s21
        %p190 = scmp.lt.s32.totalorder %s22, 1
        %s191 = scalar_select %p190, %s22, 1
        %p192 = scmp.lt.s32.totalorder %s189, 1
        %s193 = scalar_select %p192, %s189, 1
        %s194 = smul.addr %s191, 2
        %s195 = sadd.s32 %s193, %s194
        %s196 = smul.addr %s195, 4
        %s197 = scalar_lea.vmem %s0, %s196
        %s198 = smul.u32 2, %s21
        %s199 = smul.u32 2, %s21
        %v200 = vld [vmem:[%s197] sm:$0xff]
        %v201 = vld [vmem:[%s1] sm:$0xff]
        %v202 = vld [vmem:[%s2] sm:$0xff]
        %204 = vset.pattern.permute.xlu0 0
        %205 = vperm.xlu0 %204, %v201
        %v206 = vpop.permute.xlu0 %205
        %v209 = vperm.slane %v200, 0
        %v210 = vperm.slane %v200, 4
        %v213 = vperm.slane %v209, 0
        %v214 = vperm.slane %v210, 0
        %v215 = vmul.f32 %v206, %v213
        %v216 = vmul.f32 %v206, %v214
        %217 = vset.pattern.permute.xlu0 1
        %218 = vperm.xlu0 %217, %v201
        %v219 = vpop.permute.xlu0 %218
        %v221 = vperm.slane %v200, 1
        %v222 = vperm.slane %v200, 5
        %v225 = vperm.slane %v221, 1
        %v226 = vperm.slane %v222, 1
        %v227 = vmul.f32 %v219, %v225
        %v228 = vmul.f32 %v219, %v226
        %v229 = vadd.f32 %v215, %v227
        %v230 = vadd.f32 %v216, %v228
        %231 = vset.pattern.permute.xlu0 2
        %232 = vperm.xlu0 %231, %v201
        %v233 = vpop.permute.xlu0 %232
        %v235 = vperm.slane %v200, 2
        %v236 = vperm.slane %v200, 6
        %v239 = vperm.slane %v235, 2
        %v240 = vperm.slane %v236, 2
        %v241 = vmul.f32 %v233, %v239
        %v242 = vmul.f32 %v233, %v240
        %v243 = vadd.f32 %v229, %v241
        %v244 = vadd.f32 %v230, %v242
        %245 = vset.pattern.permute.xlu0 3
        %246 = vperm.xlu0 %245, %v201
        %v247 = vpop.permute.xlu0 %246
        %v249 = vperm.slane %v200, 3
        %v250 = vperm.slane %v200, 7
        %v253 = vperm.slane %v249, 3
        %v254 = vperm.slane %v250, 3
        %v255 = vmul.f32 %v247, %v253
        %v256 = vmul.f32 %v247, %v254
        %v257 = vadd.f32 %v243, %v255
        %v258 = vadd.f32 %v244, %v256
        %260 = vset.pattern.permute.xlu0 0
        %261 = vperm.xlu0 %260, %v202
        %v262 = vpop.permute.xlu0 %261
        %v264 = vadd.f32 %v257, %v262
        %v265 = vadd.f32 %v258, %v262
        %v266 = vand.u32 2147483647, %v264
        %vm267 = vcmp.le.f32.partialorder %v266, 0.7853982
        %vm268 = vcmp.lt.s32.totalorder %v264, 0
        %v269 = vand.u32 %v264, 2139095040
        %v270 = vshrl.u32 %v269, 23
        %v271 = vsub.s32 %v270, 127
        %v272 = vand.u32 2147483647, %v264
        %v273 = vand.u32 %v272, 8388607
        %v274 = vor.u32 %v273, 8388608
        %v275 = vsub.s32 0, %v274
        %v276 = vadd.s32 %v271, 1
        %vm277 = vcmp.gt.s32.totalorder %v276, 0
        %v278 = vsel %vm277, %v276, 0
        %v279 = vshrl.u32 %v278, 5
        %v280 = vand.u32 %v278, 31
        %v281 = vsub.s32 32, %v280
        %v282 = vshrl.u32 683565275, %v281
        %v283 = vshll.u32 683565275, %v280
        %v284 = vshrl.u32 2475754826, %v281
        %v285 = vor.u32 %v283, %v284
        %v286 = vshll.u32 2475754826, %v280
        %v287 = vshrl.u32 2131351028, %v281
        %v288 = vor.u32 %v286, %v287
        %v289 = vshll.u32 2131351028, %v280
        %v290 = vshrl.u32 2102212464, %v281
        %v291 = vor.u32 %v289, %v290
        %v292 = vshll.u32 2102212464, %v280
        %v293 = vshrl.u32 920167782, %v281
        %v294 = vor.u32 %v292, %v293
        %v295 = vshll.u32 920167782, %v280
        %v296 = vshrl.u32 1326507024, %v281
        %v297 = vor.u32 %v295, %v296
        %vm298 = vcmp.lt.s32.totalorder %v279, 1
        %vm299 = vcmp.lt.s32.totalorder %v279, 2
        %vm300 = vcmp.lt.s32.totalorder %v279, 3
        %vm301 = vcmp.lt.s32.totalorder %v279, 4
        %v302 = vsel %vm298, %v282, %v285
        %v303 = vsel %vm301, %v291, 2102212464
        %v304 = vsel %vm300, %v288, %v303
        %v305 = vsel %vm299, %v302, %v304
        %v306 = vsel %vm298, %v285, %v288
        %v307 = vsel %vm301, %v294, 920167782
        %v308 = vsel %vm300, %v291, %v307
        %v309 = vsel %vm299, %v306, %v308
        %v310 = vsel %vm298, %v288, %v291
        %v311 = vsel %vm301, %v297, 1326507024
        %v312 = vsel %vm300, %v294, %v311
        %v313 = vsel %vm299, %v310, %v312
        %v314 = vshll.u32 %v274, 8
        %v315 = vand.u32 %v314, 65535
        %v316 = vshrl.u32 %v314, 16
        %v317 = vand.u32 %v313, 65535
        %v318 = vshrl.u32 %v313, 16
        %v319 = vmul.u32 %v315, %v317
        %v320 = vmul.u32 %v315, %v318
        %v321 = vmul.u32 %v316, %v317
        %v322 = vmul.u32 %v316, %v318
        %v323 = vshll.u32 %v320, 16
        %v324 = vshrl.u32 %v320, 16
        %v325 = vshll.u32 %v321, 16
        %v326 = vshrl.u32 %v321, 16
        %vm327 = vc.u32 %v319, %v323
        %v328 = vsel %vm327, 1, 0
        %v329 = vadd.s32 %v319, %v323
        %v330 = vadd.s32 %v322, %v328
        %vm331 = vc.u32 %v329, %v325
        %v332 = vsel %vm331, 1, 0
        %v333 = vadd.s32 %v329, %v325
        %v334 = vadd.s32 %v330, %v332
        %v335 = vadd.s32 %v334, %v324
        %v336 = vadd.s32 %v335, %v326
        %v337 = vand.u32 %v314, 65535
        %v338 = vshrl.u32 %v314, 16
        %v339 = vand.u32 %v309, 65535
        %v340 = vshrl.u32 %v309, 16
        %v341 = vmul.u32 %v337, %v339
        %v342 = vmul.u32 %v337, %v340
        %v343 = vmul.u32 %v338, %v339
        %v344 = vmul.u32 %v338, %v340
        %v345 = vshll.u32 %v342, 16
        %v346 = vshrl.u32 %v342, 16
        %v347 = vshll.u32 %v343, 16
        %v348 = vshrl.u32 %v343, 16
        %vm349 = vc.u32 %v341, %v345
        %v350 = vsel %vm349, 1, 0
        %v351 = vadd.s32 %v341, %v345
        %v352 = vadd.s32 %v344, %v350
        %vm353 = vc.u32 %v351, %v347
        %v354 = vsel %vm353, 1, 0
        %v355 = vadd.s32 %v351, %v347
        %v356 = vadd.s32 %v352, %v354
        %v357 = vadd.s32 %v356, %v346
        %v358 = vadd.s32 %v357, %v348
        %v359 = vmul.u32 %v314, %v305
        %v360 = vadd.s32 %v336, %v355
        %vm361 = vc.u32 %v336, %v355
        %v362 = vadd.s32 %v358, 1
        %v363 = vsel %vm361, %v362, %v358
        %v364 = vadd.s32 %v359, %v363
        %v365 = vadd.s32 %v364, 536870912
        %v366 = vshrl.u32 %v365, 30
        %v367 = vshll.u32 %v366, 30
        %v368 = vsub.s32 %v364, %v367
        %vm369 = vcmp.lt.s32.totalorder %v368, 0
        %v370 = vsub.s32 0, %v368
        %v371 = vsel %vm369, %v370, %v368
        %v372 = vclz %v371
        %v373 = vsub.s32 %v372, 2
        %vm374 = vcmp.gt.s32.totalorder 0, %v373
        %v375 = vsel %vm374, 0, %v373
        %v376 = vsub.s32 32, %v375
        %v377 = vshll.u32 %v368, %v375
        %v378 = vshrl.u32 %v360, %v376
        %v379 = vor.u32 %v377, %v378
        %v380 = vsub.s32 4294967266, %v375
        %v381 = vadd.s32 %v380, 127
        %v382 = vshll.u32 %v381, 23
        %v383 = vor.u32 4788187, %v382
        %v384 = vand.u32 2147483647, %v383
        %v386 = vcvt.s32.f32 %v379
        %v387 = vmul.f32 %v386, %v384
        %v388 = vxor.u32 %v387, 2147483648
        %v389 = vsel %vm268, %v388, %v387
        %v390 = vsub.s32 4, %v366
        %v391 = vsel %vm268, %v390, %v366
        %v392 = vsel %vm267, %v264, %v389
        %v393 = vsel %vm267, 0, %v391
        %v394 = vmul.f32 %v392, %v392
        %v395 = vmul.f32 %v394, -0.001358992
        %v396 = vadd.f32 %v395, 0.041655596
        %v397 = vmul.f32 %v394, %v396
        %v398 = vadd.f32 %v397, -0.4999988
        %v399 = vmul.f32 %v394, %v398
        %v400 = vadd.f32 1.0, %v399
        %v401 = vmul.f32 %v392, %v392
        %v402 = vmul.f32 %v401, -0.00019511016
        %v403 = vadd.f32 %v402, 0.008332121
        %v404 = vmul.f32 %v401, %v403
        %v405 = vadd.f32 %v404, -0.16666654
        %v406 = vmul.f32 %v401, %v405
        %v407 = vadd.f32 %v406, 1.0
        %v408 = vmul.f32 %v407, %v392
        %vm409 = vweird.f32 %v264
        %v410 = vadd.s32 %v393, 3
        %v411 = vand.u32 %v410, 3
        %vm412 = vcmp.lt.s32.totalorder %v411, 2
        %vm413 = vcmp.eq.s32.totalorder %v411, 0
        %v414 = vxor.u32 %v408, 2147483648
        %v415 = vsel %vm413, %v400, %v414
        %vm416 = vcmp.eq.s32.totalorder %v411, 2
        %v417 = vxor.u32 %v400, 2147483648
        %v418 = vsel %vm416, %v417, %v408
        %v419 = vsel %vm412, %v415, %v418
        %v420 = vsel %vm409, nan, %v419
        %v421 = vand.u32 2147483647, %v265
        %vm422 = vcmp.le.f32.partialorder %v421, 0.7853982
        %vm423 = vcmp.lt.s32.totalorder %v265, 0
        %v424 = vand.u32 %v265, 2139095040
        %v425 = vshrl.u32 %v424, 23
        %v426 = vsub.s32 %v425, 127
        %v427 = vand.u32 2147483647, %v265
        %v428 = vand.u32 %v427, 8388607
        %v429 = vor.u32 %v428, 8388608
        %v430 = vsub.s32 0, %v429
        %v431 = vadd.s32 %v426, 1
        %vm432 = vcmp.gt.s32.totalorder %v431, 0
        %v433 = vsel %vm432, %v431, 0
        %v434 = vshrl.u32 %v433, 5
        %v435 = vand.u32 %v433, 31
        %v436 = vsub.s32 32, %v435
        %v437 = vshrl.u32 683565275, %v436
        %v438 = vshll.u32 683565275, %v435
        %v439 = vshrl.u32 2475754826, %v436
        %v440 = vor.u32 %v438, %v439
        %v441 = vshll.u32 2475754826, %v435
        %v442 = vshrl.u32 2131351028, %v436
        %v443 = vor.u32 %v441, %v442
        %v444 = vshll.u32 2131351028, %v435
        %v445 = vshrl.u32 2102212464, %v436
        %v446 = vor.u32 %v444, %v445
        %v447 = vshll.u32 2102212464, %v435
        %v448 = vshrl.u32 920167782, %v436
        %v449 = vor.u32 %v447, %v448
        %v450 = vshll.u32 920167782, %v435
        %v451 = vshrl.u32 1326507024, %v436
        %v452 = vor.u32 %v450, %v451
        %vm453 = vcmp.lt.s32.totalorder %v434, 1
        %vm454 = vcmp.lt.s32.totalorder %v434, 2
        %vm455 = vcmp.lt.s32.totalorder %v434, 3
        %vm456 = vcmp.lt.s32.totalorder %v434, 4
        %v457 = vsel %vm453, %v437, %v440
        %v458 = vsel %vm456, %v446, 2102212464
        %v459 = vsel %vm455, %v443, %v458
        %v460 = vsel %vm454, %v457, %v459
        %v461 = vsel %vm453, %v440, %v443
        %v462 = vsel %vm456, %v449, 920167782
        %v463 = vsel %vm455, %v446, %v462
        %v464 = vsel %vm454, %v461, %v463
        %v465 = vsel %vm453, %v443, %v446
        %v466 = vsel %vm456, %v452, 1326507024
        %v467 = vsel %vm455, %v449, %v466
        %v468 = vsel %vm454, %v465, %v467
        %v469 = vshll.u32 %v429, 8
        %v470 = vand.u32 %v469, 65535
        %v471 = vshrl.u32 %v469, 16
        %v472 = vand.u32 %v468, 65535
        %v473 = vshrl.u32 %v468, 16
        %v474 = vmul.u32 %v470, %v472
        %v475 = vmul.u32 %v470, %v473
        %v476 = vmul.u32 %v471, %v472
        %v477 = vmul.u32 %v471, %v473
        %v478 = vshll.u32 %v475, 16
        %v479 = vshrl.u32 %v475, 16
        %v480 = vshll.u32 %v476, 16
        %v481 = vshrl.u32 %v476, 16
        %vm482 = vc.u32 %v474, %v478
        %v483 = vsel %vm482, 1, 0
        %v484 = vadd.s32 %v474, %v478
        %v485 = vadd.s32 %v477, %v483
        %vm486 = vc.u32 %v484, %v480
        %v487 = vsel %vm486, 1, 0
        %v488 = vadd.s32 %v484, %v480
        %v489 = vadd.s32 %v485, %v487
        %v490 = vadd.s32 %v489, %v479
        %v491 = vadd.s32 %v490, %v481
        %v492 = vand.u32 %v469, 65535
        %v493 = vshrl.u32 %v469, 16
        %v494 = vand.u32 %v464, 65535
        %v495 = vshrl.u32 %v464, 16
        %v496 = vmul.u32 %v492, %v494
        %v497 = vmul.u32 %v492, %v495
        %v498 = vmul.u32 %v493, %v494
        %v499 = vmul.u32 %v493, %v495
        %v500 = vshll.u32 %v497, 16
        %v501 = vshrl.u32 %v497, 16
        %v502 = vshll.u32 %v498, 16
        %v503 = vshrl.u32 %v498, 16
        %vm504 = vc.u32 %v496, %v500
        %v505 = vsel %vm504, 1, 0
        %v506 = vadd.s32 %v496, %v500
        %v507 = vadd.s32 %v499, %v505
        %vm508 = vc.u32 %v506, %v502
        %v509 = vsel %vm508, 1, 0
        %v510 = vadd.s32 %v506, %v502
        %v511 = vadd.s32 %v507, %v509
        %v512 = vadd.s32 %v511, %v501
        %v513 = vadd.s32 %v512, %v503
        %v514 = vmul.u32 %v469, %v460
        %v515 = vadd.s32 %v491, %v510
        %vm516 = vc.u32 %v491, %v510
        %v517 = vadd.s32 %v513, 1
        %v518 = vsel %vm516, %v517, %v513
        %v519 = vadd.s32 %v514, %v518
        %v520 = vadd.s32 %v519, 536870912
        %v521 = vshrl.u32 %v520, 30
        %v522 = vshll.u32 %v521, 30
        %v523 = vsub.s32 %v519, %v522
        %vm524 = vcmp.lt.s32.totalorder %v523, 0
        %v525 = vsub.s32 0, %v523
        %v526 = vsel %vm524, %v525, %v523
        %v527 = vclz %v526
        %v528 = vsub.s32 %v527, 2
        %vm529 = vcmp.gt.s32.totalorder 0, %v528
        %v530 = vsel %vm529, 0, %v528
        %v531 = vsub.s32 32, %v530
        %v532 = vshll.u32 %v523, %v530
        %v533 = vshrl.u32 %v515, %v531
        %v534 = vor.u32 %v532, %v533
        %v535 = vsub.s32 4294967266, %v530
        %v536 = vadd.s32 %v535, 127
        %v537 = vshll.u32 %v536, 23
        %v538 = vor.u32 4788187, %v537
        %v539 = vand.u32 2147483647, %v538
        %v541 = vcvt.s32.f32 %v534
        %v542 = vmul.f32 %v541, %v539
        %v543 = vxor.u32 %v542, 2147483648
        %v544 = vsel %vm423, %v543, %v542
        %v545 = vsub.s32 4, %v521
        %v546 = vsel %vm423, %v545, %v521
        %v547 = vsel %vm422, %v265, %v544
        %v548 = vsel %vm422, 0, %v546
        %v549 = vmul.f32 %v547, %v547
        %v550 = vmul.f32 %v549, -0.001358992
        %v551 = vadd.f32 %v550, 0.041655596
        %v552 = vmul.f32 %v549, %v551
        %v553 = vadd.f32 %v552, -0.4999988
        %v554 = vmul.f32 %v549, %v553
        %v555 = vadd.f32 1.0, %v554
        %v556 = vmul.f32 %v547, %v547
        %v557 = vmul.f32 %v556, -0.00019511016
        %v558 = vadd.f32 %v557, 0.008332121
        %v559 = vmul.f32 %v556, %v558
        %v560 = vadd.f32 %v559, -0.16666654
        %v561 = vmul.f32 %v556, %v560
        %v562 = vadd.f32 %v561, 1.0
        %v563 = vmul.f32 %v562, %v547
        %vm564 = vweird.f32 %v265
        %v565 = vadd.s32 %v548, 3
        %v566 = vand.u32 %v565, 3
        %vm567 = vcmp.lt.s32.totalorder %v566, 2
        %vm568 = vcmp.eq.s32.totalorder %v566, 0
        %v569 = vxor.u32 %v563, 2147483648
        %v570 = vsel %vm568, %v555, %v569
        %vm571 = vcmp.eq.s32.totalorder %v566, 2
        %v572 = vxor.u32 %v555, 2147483648
        %v573 = vsel %vm571, %v572, %v563
        %v574 = vsel %vm567, %v570, %v573
        %v575 = vsel %vm564, nan, %v574
        %576 = vst [vmem:[%s188] sm:$0xff] %v420
        %577 = vst [vmem:[%s188 + $0x8] sm:$0xff] %v575
        %s578 = sand.u32 %s109, 1
        %s579 = scalar_lea.sflag [#allocation3], %s578
        %s580 = sand.u32 %s109, 1
        %s581 = smul.addr %s580, 16
        %s582 = scalar_lea.vmem [#allocation2], %s581
        // Predicated region
        $region33: #{tpu_custom_call.1} parent=31 // pred_check
          %p583 = pneg %p119
        $region34: #{tpu_custom_call.1} parent=31 // pred_check_branch
          %585 = sbr.rel (%p583) target = $region36
        $region35: #{tpu_custom_call.1} parent=31 // pred_region
          %s586 = smul.u32 2, %s21
          %588 = vsyncadd %s579, 0
          %s589 = smul.addr %s22, 2
          %s590 = sadd.s32 %s586, %s589
          %s591 = smul.addr %s590, 8
          %s592 = scalar_lea.hbm %s3, %s591
          %s594 = sshll.u32 %s582, 4
          %s595 = int_to_ptr.vmem [resolvable:$true] %s594
          %s596 = sshll.u32 %s592, 4
          %s597 = int_to_ptr.hbm [resolvable:$true] %s596
          %599 = dma.vmem_to_hbm [thread:$0]  %s595, 256, %s597, %s579
        $region36: #{tpu_custom_call.1} parent=31 // pred_fallthru
          _
      $region32: #{tpu_custom_call.1} parent=5 // pred_fallthru
        _
      %p600 = scmp.le.s32.totalorder 2, %s12
      // Predicated region
      $region37: #{tpu_custom_call.1} parent=5 // pred_check
        %p601 = pneg %p600
      $region38: #{tpu_custom_call.1} parent=5 // pred_check_branch
        %603 = sbr.rel (%p601) target = $region40
      $region39: #{tpu_custom_call.1} parent=5 // pred_region
        %s604 = ssub.s32 %s12, 2
        // Predicated region
        $region41: #{tpu_custom_call.1} parent=39 // pred_check
          %p605 = pneg %p125
        $region42: #{tpu_custom_call.1} parent=39 // pred_check_branch
          %607 = sbr.rel (%p605) target = $region44
        $region43: #{tpu_custom_call.1} parent=39 // pred_region
          %s608 = sand.u32 %s110, 1
          %s609 = scalar_lea.sflag [#allocation3], %s608
          %s610 = sand.u32 %s110, 1
          %s611 = smul.addr %s610, 16
          %s612 = scalar_lea.vmem [#allocation2], %s611
          %614 = dma.done %s609, 256
        $region44: #{tpu_custom_call.1} parent=39 // pred_fallthru
          _
      $region40: #{tpu_custom_call.1} parent=5 // pred_fallthru
        _
    $region6: #{tpu_custom_call.1} parent=1 // loop_footer
      %s16 = sadd.s32 1, %s12
    $region7: #{tpu_custom_call.1} parent=1 // loop_footer_branch
      %11 = sbr.rel target = $region3
    $region8: #{tpu_custom_call.1} parent=1 // loop_exit
      _
    %615 = vsyncpa [#allocation3], 1
    %s616 = scalar_lea.sflag [#allocation3], 1
    %617 = vsyncpa %s616, 1

</llo_original>
